<compile_context>
chip_gen: v5e
topology: v5e:2x2
jax: 0.10.0
libtpu: 0.0.40
codegen_flags: <defaults>
</compile_context>

<pallas_src>
import functools
import math

import jax
import jax.numpy as jnp
from jax.experimental import pallas as pl
from jax.experimental.pallas import tpu as pltpu

FILTERS = (3, 3, 3, 3)
ALL_FILTERS = (1,) + FILTERS + (1,)
N_LAYERS = len(FILTERS) + 1          # 5
INIT_SCALE = 10.0
LIKELIHOOD_BOUND = 1e-9
HALF = 0.5


# ---------------------------------------------------------------------------
# Parameter construction (deterministic, mirrors FullyFactorized.__init__)
# ---------------------------------------------------------------------------
def make_params(channels, key):
    scale = INIT_SCALE ** (1.0 / (len(FILTERS) + 1))
    matrices, biases, factors = [], [], []
    keys = jax.random.split(key, N_LAYERS)
    for i in range(N_LAYERS):
        f_in, f_out = ALL_FILTERS[i], ALL_FILTERS[i + 1]
        init_val = math.log(math.expm1(1.0 / scale / f_out))
        # matrix[c, j*f_in + k]  <->  torch matrix[c, j, k]
        matrices.append(jnp.full((channels, f_out * f_in), init_val, jnp.float32))
        biases.append(
            jax.random.uniform(keys[i], (channels, f_out), jnp.float32, -0.5, 0.5)
        )
        if i < len(FILTERS):
            factors.append(jnp.zeros((channels, f_out), jnp.float32))
    return matrices, biases, factors


# ---------------------------------------------------------------------------
# Packed-parameter column layout (static)
# ---------------------------------------------------------------------------
def _param_layout():
    col = 0
    m_off, b_off, f_off = [], [], []
    # layer 0: softplus(matrix0), (b0 - 0.5*w0), (b0 + 0.5*w0), tanh(factor0)
    m_off.append(col); col += ALL_FILTERS[1] * ALL_FILTERS[0]
    blo_off = col;     col += ALL_FILTERS[1]
    bup_off = col;     col += ALL_FILTERS[1]
    f_off.append(col); col += ALL_FILTERS[1]
    b_off.append(-1)
    for i in range(1, N_LAYERS):
        f_in, f_out = ALL_FILTERS[i], ALL_FILTERS[i + 1]
        m_off.append(col); col += f_out * f_in
        b_off.append(col); col += f_out
        if i < N_LAYERS - 1:
            f_off.append(col); col += f_out
        else:
            f_off.append(-1)
    return tuple(m_off), blo_off, bup_off, tuple(b_off), tuple(f_off), col


# ---------------------------------------------------------------------------
# Pallas kernel
# ---------------------------------------------------------------------------
def fully_factorized_kernel(x_ref, p_ref, out_ref, *,
                            m_off, blo_off, bup_off, b_off, f_off):
    x = x_ref[...]                    # (Rb, TL) f32
    p = p_ref[...]                    # (Rb, P)  f32 (softplus/tanh/bias-fold done)

    def col(c):
        return p[:, c:c + 1]          # (Rb, 1), broadcasts over lanes

    # ---- layer 0 (f_in = 1): share w*x between (x-0.5) and (x+0.5) paths;
    # layer-0 affine constants were folded into the packed table.
    f_out0 = ALL_FILTERS[1]
    lower, upper = [], []
    for j in range(f_out0):
        w = col(m_off[0] + j)
        ft = col(f_off[0] + j)
        wx = w * x
        lo = wx + col(blo_off + j)    # = w*(x - 0.5) + b
        up = wx + col(bup_off + j)    # = w*(x + 0.5) + b
        lower.append(lo + ft * jnp.tanh(lo))
        upper.append(up + ft * jnp.tanh(up))

    branches = [lower, upper]

    # ---- layers 1 .. 4: weight columns read once, applied to both branches
    for i in range(1, N_LAYERS):
        f_in, f_out = ALL_FILTERS[i], ALL_FILTERS[i + 1]
        w = [col(m_off[i] + jk) for jk in range(f_out * f_in)]
        b = [col(b_off[i] + j) for j in range(f_out)]
        ft = ([col(f_off[i] + j) for j in range(f_out)]
              if i < N_LAYERS - 1 else None)
        new_branches = []
        for br in branches:
            new = []
            for j in range(f_out):
                acc = b[j] + w[j * f_in] * br[0]
                for k in range(1, f_in):
                    acc = acc + w[j * f_in + k] * br[k]
                new.append(acc)
            if ft is not None:
                new = [v + ft[j] * jnp.tanh(v) for j, v in enumerate(new)]
            new_branches.append(new)
        branches = new_branches

    lower_out = branches[0][0]
    upper_out = branches[1][0]
    # sigmoid(u) - sigmoid(l) == 0.5 * (tanh(u/2) - tanh(l/2))  (exact identity);
    # keeps all transcendentals as single EUP tanh ops.
    likelihood = 0.5 * (jnp.tanh(0.5 * upper_out) - jnp.tanh(0.5 * lower_out))
    # LowerBound(1e-9) forward == elementwise max
    out_ref[...] = jnp.maximum(likelihood, LIKELIHOOD_BOUND)


# ---------------------------------------------------------------------------
# Wrapper (layout, parameter packing, generation-aware tiling)
# ---------------------------------------------------------------------------
def _vmem_capacity_bytes():
    try:
        cap = int(getattr(pltpu.get_tpu_info(), "vmem_capacity_bytes", 0))
        if cap > 0:
            return cap
    except Exception:
        pass
    return 64 * 1024 * 1024           # conservative fallback (v7x per-TC VMEM)


def fully_factorized_forward(x, matrices, biases, factors, *, tile_l=8192):
    N, C, H, W = x.shape
    rows = N * C
    L = H * W

    # ---- pack per-channel params; nonlinearities + layer-0 bias fold hoisted
    m_off, blo_off, bup_off, b_off, f_off, P = _param_layout()
    w0 = jax.nn.softplus(matrices[0])
    b0 = biases[0]
    cols = [w0, b0 - HALF * w0, b0 + HALF * w0, jnp.tanh(factors[0])]
    for i in range(1, N_LAYERS):
        cols.append(jax.nn.softplus(matrices[i]))
        cols.append(biases[i])
        if i < N_LAYERS - 1:
            cols.append(jnp.tanh(factors[i]))
    packed = jnp.concatenate(cols, axis=1).astype(jnp.float32)    # (C, P)
    # row r = n*C + c of the flattened input uses channel c's parameters
    packed = jnp.tile(packed, (N, 1))                             # (N*C, P)

    # ---- row (channel*batch) blocking: multiple of 8, <= 256
    rows8 = ((rows + 7) // 8) * 8
    if rows8 <= 256:
        row_block = rows8
    else:
        row_block = 8
        for cand in range(256, 7, -8):
            if rows8 % cand == 0:
                row_block = cand
                break
    rows_p = ((rows8 + row_block - 1) // row_block) * row_block

    # ---- generation-aware VMEM budget (v7x: 64 MiB -> ~48 MiB limit,
    # v5e/v6e: 128 MiB -> ~96 MiB limit) and lane tiling
    vmem_cap = _vmem_capacity_bytes()
    vmem_limit = min(vmem_cap - 16 * 1024 * 1024, (vmem_cap * 3) // 4)
    temp_budget = max(8 * 1024 * 1024, (vmem_limit * 2) // 3)
    n_live = 24                       # ~live full-tile f32 temps + I/O buffers
    max_tile = max(256, ((temp_budget // (n_live * 4 * row_block)) // 128) * 128)

    Lc = ((L + 127) // 128) * 128
    tile_l = max(128, (tile_l // 128) * 128)
    tile_l = min(tile_l, max_tile, Lc)

    # keep >= 4 grid steps where possible so both v7x TensorCores get work
    while (rows_p // row_block) * ((Lc + tile_l - 1) // tile_l) < 4 and tile_l > 512:
        tile_l = max(512, ((tile_l // 2) // 128) * 128)

    Lp = ((L + tile_l - 1) // tile_l) * tile_l

    # Free, contiguous flatten of NCHW into (rows, spatial); pad tails with 0.
    xr = x.reshape(rows, L).astype(jnp.float32)
    if rows_p != rows or Lp != L:
        xr = jnp.pad(xr, ((0, rows_p - rows), (0, Lp - L)))
    if rows_p != rows:
        packed = jnp.pad(packed, ((0, rows_p - rows), (0, 0)))

    grid = (rows_p // row_block, Lp // tile_l)
    x_spec = pl.BlockSpec((row_block, tile_l), lambda r, l: (r, l))
    # param block is tiny (~row_block*P*4 bytes); default buffering is fine.
    p_spec = pl.BlockSpec((row_block, P), lambda r, l: (r, 0))
    out_spec = pl.BlockSpec((row_block, tile_l), lambda r, l: (r, l))

    total = rows_p * Lp
    out = pl.pallas_call(
        functools.partial(fully_factorized_kernel, m_off=m_off, blo_off=blo_off,
                          bup_off=bup_off, b_off=b_off, f_off=f_off),
        grid=grid,
        in_specs=[x_spec, p_spec],
        out_specs=out_spec,
        out_shape=jax.ShapeDtypeStruct((rows_p, Lp), jnp.float32),
        compiler_params=pltpu.CompilerParams(
            dimension_semantics=("parallel", "parallel"),
            vmem_limit_bytes=int(vmem_limit)),
        cost_estimate=pl.CostEstimate(
            flops=182 * total, transcendentals=26 * total,
            bytes_accessed=8 * total),
    )(xr, packed)

    return out[:rows, :L].reshape(N, C, H, W)


# ---------------------------------------------------------------------------
# Pure-JAX reference (mirrors the torch code exactly)
# ---------------------------------------------------------------------------
def reference_forward(x, matrices, biases, factors):
    N, C, H, W = x.shape
    xr = jnp.transpose(x, (1, 0, 2, 3)).reshape(C, 1, -1).astype(jnp.float32)

    def logits_cum(v):
        logits = v
        for i in range(N_LAYERS):
            f_in, f_out = ALL_FILTERS[i], ALL_FILTERS[i + 1]
            M = jax.nn.softplus(matrices[i].reshape(C, f_out, f_in))
            b = biases[i].reshape(C, f_out, 1)
            logits = jnp.matmul(M, logits) + b
            if i < len(FILTERS):
                fct = factors[i].reshape(C, f_out, 1)
                logits = logits + jnp.tanh(fct) * jnp.tanh(logits)
        return logits

    lower = logits_cum(xr - HALF)
    upper = logits_cum(xr + HALF)
    lik = jnp.maximum(jax.nn.sigmoid(upper) - jax.nn.sigmoid(lower),
                      LIKELIHOOD_BOUND)
    return jnp.transpose(lik.reshape(C, N, H, W), (1, 0, 2, 3))


# TODO(synk): compress()/decompress() use a CPU range/ANS entropy coder and
# update() builds quantized CDFs on host — no Pallas equivalent; only forward()
# (the likelihood computation) is implemented here.

if __name__ == "__main__":
    key = jax.random.PRNGKey(0)
    k_x, k_p = jax.random.split(key)

    N, C, H, W = 2, 4, 16, 16
    x = jax.random.normal(k_x, (N, C, H, W), dtype=jnp.float32) * 3.0

    matrices, biases, factors = make_params(C, k_p)

    out = fully_factorized_forward(x, matrices, biases, factors)
    out = jax.block_until_ready(out)

    ref = reference_forward(x, matrices, biases, factors)
    assert out.shape == (N, C, H, W)
    assert jnp.allclose(out, ref, atol=1e-5, rtol=1e-5), (
        float(jnp.max(jnp.abs(out - ref))))

    print("KERNEL_OK")
</pallas_src>

<mosaic_0001>
module attributes {stable_mosaic.version = 11 : i64} {
  func.func @fully_factorized_kernel(%arg0: i32, %arg1: i32, %arg2: memref<8x256xf32, #tpu.memory_space<vmem>>, %arg3: memref<8x61xf32, #tpu.memory_space<vmem>>, %arg4: memref<8x256xf32, #tpu.memory_space<vmem>>) attributes {dimension_semantics = [#tpu.dimension_semantics<parallel>, #tpu.dimension_semantics<parallel>], iteration_bounds = array<i64: 1, 1>, scalar_prefetch = 0 : i64, scratch_operands = 0 : i64, tpu.core_type = #tpu.core_type<tc>, window_params = [{transform_indices = @transform_0, window_bounds = array<i64: 8, 256>}, {transform_indices = @transform_1, window_bounds = array<i64: 8, 61>}, {transform_indices = @transform_2, window_bounds = array<i64: 8, 256>}]} {
    %c0 = arith.constant 0 : index
    %c0_0 = arith.constant 0 : index
    %0 = vector.load %arg2[%c0, %c0_0] : memref<8x256xf32, #tpu.memory_space<vmem>>, vector<8x256xf32>
    %c0_1 = arith.constant 0 : index
    %c0_2 = arith.constant 0 : index
    %1 = vector.load %arg3[%c0_1, %c0_2] : memref<8x61xf32, #tpu.memory_space<vmem>>, vector<8x61xf32>
    %2 = vector.extract_strided_slice %1 {offsets = [0, 0], sizes = [8, 1], strides = [1, 1]} : vector<8x61xf32> to vector<8x1xf32>
    %3 = vector.extract_strided_slice %1 {offsets = [0, 9], sizes = [8, 1], strides = [1, 1]} : vector<8x61xf32> to vector<8x1xf32>
    %4 = vector.broadcast %2 : vector<8x1xf32> to vector<8x256xf32>
    %5 = arith.mulf %4, %0 : vector<8x256xf32>
    %6 = vector.extract_strided_slice %1 {offsets = [0, 3], sizes = [8, 1], strides = [1, 1]} : vector<8x61xf32> to vector<8x1xf32>
    %7 = vector.broadcast %6 : vector<8x1xf32> to vector<8x256xf32>
    %8 = arith.addf %5, %7 : vector<8x256xf32>
    %9 = vector.extract_strided_slice %1 {offsets = [0, 6], sizes = [8, 1], strides = [1, 1]} : vector<8x61xf32> to vector<8x1xf32>
    %10 = vector.broadcast %9 : vector<8x1xf32> to vector<8x256xf32>
    %11 = arith.addf %5, %10 : vector<8x256xf32>
    %12 = math.tanh %8 : vector<8x256xf32>
    %13 = vector.broadcast %3 : vector<8x1xf32> to vector<8x256xf32>
    %14 = arith.mulf %13, %12 : vector<8x256xf32>
    %15 = arith.addf %8, %14 : vector<8x256xf32>
    %16 = math.tanh %11 : vector<8x256xf32>
    %17 = vector.broadcast %3 : vector<8x1xf32> to vector<8x256xf32>
    %18 = arith.mulf %17, %16 : vector<8x256xf32>
    %19 = arith.addf %11, %18 : vector<8x256xf32>
    %20 = vector.extract_strided_slice %1 {offsets = [0, 1], sizes = [8, 1], strides = [1, 1]} : vector<8x61xf32> to vector<8x1xf32>
    %21 = vector.extract_strided_slice %1 {offsets = [0, 10], sizes = [8, 1], strides = [1, 1]} : vector<8x61xf32> to vector<8x1xf32>
    %22 = vector.broadcast %20 : vector<8x1xf32> to vector<8x256xf32>
    %23 = arith.mulf %22, %0 : vector<8x256xf32>
    %24 = vector.extract_strided_slice %1 {offsets = [0, 4], sizes = [8, 1], strides = [1, 1]} : vector<8x61xf32> to vector<8x1xf32>
    %25 = vector.broadcast %24 : vector<8x1xf32> to vector<8x256xf32>
    %26 = arith.addf %23, %25 : vector<8x256xf32>
    %27 = vector.extract_strided_slice %1 {offsets = [0, 7], sizes = [8, 1], strides = [1, 1]} : vector<8x61xf32> to vector<8x1xf32>
    %28 = vector.broadcast %27 : vector<8x1xf32> to vector<8x256xf32>
    %29 = arith.addf %23, %28 : vector<8x256xf32>
    %30 = math.tanh %26 : vector<8x256xf32>
    %31 = vector.broadcast %21 : vector<8x1xf32> to vector<8x256xf32>
    %32 = arith.mulf %31, %30 : vector<8x256xf32>
    %33 = arith.addf %26, %32 : vector<8x256xf32>
    %34 = math.tanh %29 : vector<8x256xf32>
    %35 = vector.broadcast %21 : vector<8x1xf32> to vector<8x256xf32>
    %36 = arith.mulf %35, %34 : vector<8x256xf32>
    %37 = arith.addf %29, %36 : vector<8x256xf32>
    %38 = vector.extract_strided_slice %1 {offsets = [0, 2], sizes = [8, 1], strides = [1, 1]} : vector<8x61xf32> to vector<8x1xf32>
    %39 = vector.extract_strided_slice %1 {offsets = [0, 11], sizes = [8, 1], strides = [1, 1]} : vector<8x61xf32> to vector<8x1xf32>
    %40 = vector.broadcast %38 : vector<8x1xf32> to vector<8x256xf32>
    %41 = arith.mulf %40, %0 : vector<8x256xf32>
    %42 = vector.extract_strided_slice %1 {offsets = [0, 5], sizes = [8, 1], strides = [1, 1]} : vector<8x61xf32> to vector<8x1xf32>
    %43 = vector.broadcast %42 : vector<8x1xf32> to vector<8x256xf32>
    %44 = arith.addf %41, %43 : vector<8x256xf32>
    %45 = vector.extract_strided_slice %1 {offsets = [0, 8], sizes = [8, 1], strides = [1, 1]} : vector<8x61xf32> to vector<8x1xf32>
    %46 = vector.broadcast %45 : vector<8x1xf32> to vector<8x256xf32>
    %47 = arith.addf %41, %46 : vector<8x256xf32>
    %48 = math.tanh %44 : vector<8x256xf32>
    %49 = vector.broadcast %39 : vector<8x1xf32> to vector<8x256xf32>
    %50 = arith.mulf %49, %48 : vector<8x256xf32>
    %51 = arith.addf %44, %50 : vector<8x256xf32>
    %52 = math.tanh %47 : vector<8x256xf32>
    %53 = vector.broadcast %39 : vector<8x1xf32> to vector<8x256xf32>
    %54 = arith.mulf %53, %52 : vector<8x256xf32>
    %55 = arith.addf %47, %54 : vector<8x256xf32>
    %56 = vector.extract_strided_slice %1 {offsets = [0, 12], sizes = [8, 1], strides = [1, 1]} : vector<8x61xf32> to vector<8x1xf32>
    %57 = vector.extract_strided_slice %1 {offsets = [0, 13], sizes = [8, 1], strides = [1, 1]} : vector<8x61xf32> to vector<8x1xf32>
    %58 = vector.extract_strided_slice %1 {offsets = [0, 14], sizes = [8, 1], strides = [1, 1]} : vector<8x61xf32> to vector<8x1xf32>
    %59 = vector.extract_strided_slice %1 {offsets = [0, 15], sizes = [8, 1], strides = [1, 1]} : vector<8x61xf32> to vector<8x1xf32>
    %60 = vector.extract_strided_slice %1 {offsets = [0, 16], sizes = [8, 1], strides = [1, 1]} : vector<8x61xf32> to vector<8x1xf32>
    %61 = vector.extract_strided_slice %1 {offsets = [0, 17], sizes = [8, 1], strides = [1, 1]} : vector<8x61xf32> to vector<8x1xf32>
    %62 = vector.extract_strided_slice %1 {offsets = [0, 18], sizes = [8, 1], strides = [1, 1]} : vector<8x61xf32> to vector<8x1xf32>
    %63 = vector.extract_strided_slice %1 {offsets = [0, 19], sizes = [8, 1], strides = [1, 1]} : vector<8x61xf32> to vector<8x1xf32>
    %64 = vector.extract_strided_slice %1 {offsets = [0, 20], sizes = [8, 1], strides = [1, 1]} : vector<8x61xf32> to vector<8x1xf32>
    %65 = vector.extract_strided_slice %1 {offsets = [0, 21], sizes = [8, 1], strides = [1, 1]} : vector<8x61xf32> to vector<8x1xf32>
    %66 = vector.extract_strided_slice %1 {offsets = [0, 22], sizes = [8, 1], strides = [1, 1]} : vector<8x61xf32> to vector<8x1xf32>
    %67 = vector.extract_strided_slice %1 {offsets = [0, 23], sizes = [8, 1], strides = [1, 1]} : vector<8x61xf32> to vector<8x1xf32>
    %68 = vector.extract_strided_slice %1 {offsets = [0, 24], sizes = [8, 1], strides = [1, 1]} : vector<8x61xf32> to vector<8x1xf32>
    %69 = vector.extract_strided_slice %1 {offsets = [0, 25], sizes = [8, 1], strides = [1, 1]} : vector<8x61xf32> to vector<8x1xf32>
    %70 = vector.extract_strided_slice %1 {offsets = [0, 26], sizes = [8, 1], strides = [1, 1]} : vector<8x61xf32> to vector<8x1xf32>
    %71 = vector.broadcast %56 : vector<8x1xf32> to vector<8x256xf32>
    %72 = arith.mulf %71, %15 : vector<8x256xf32>
    %73 = vector.broadcast %65 : vector<8x1xf32> to vector<8x256xf32>
    %74 = arith.addf %73, %72 : vector<8x256xf32>
    %75 = vector.broadcast %57 : vector<8x1xf32> to vector<8x256xf32>
    %76 = arith.mulf %75, %33 : vector<8x256xf32>
    %77 = arith.addf %74, %76 : vector<8x256xf32>
    %78 = vector.broadcast %58 : vector<8x1xf32> to vector<8x256xf32>
    %79 = arith.mulf %78, %51 : vector<8x256xf32>
    %80 = arith.addf %77, %79 : vector<8x256xf32>
    %81 = vector.broadcast %59 : vector<8x1xf32> to vector<8x256xf32>
    %82 = arith.mulf %81, %15 : vector<8x256xf32>
    %83 = vector.broadcast %66 : vector<8x1xf32> to vector<8x256xf32>
    %84 = arith.addf %83, %82 : vector<8x256xf32>
    %85 = vector.broadcast %60 : vector<8x1xf32> to vector<8x256xf32>
    %86 = arith.mulf %85, %33 : vector<8x256xf32>
    %87 = arith.addf %84, %86 : vector<8x256xf32>
    %88 = vector.broadcast %61 : vector<8x1xf32> to vector<8x256xf32>
    %89 = arith.mulf %88, %51 : vector<8x256xf32>
    %90 = arith.addf %87, %89 : vector<8x256xf32>
    %91 = vector.broadcast %62 : vector<8x1xf32> to vector<8x256xf32>
    %92 = arith.mulf %91, %15 : vector<8x256xf32>
    %93 = vector.broadcast %67 : vector<8x1xf32> to vector<8x256xf32>
    %94 = arith.addf %93, %92 : vector<8x256xf32>
    %95 = vector.broadcast %63 : vector<8x1xf32> to vector<8x256xf32>
    %96 = arith.mulf %95, %33 : vector<8x256xf32>
    %97 = arith.addf %94, %96 : vector<8x256xf32>
    %98 = vector.broadcast %64 : vector<8x1xf32> to vector<8x256xf32>
    %99 = arith.mulf %98, %51 : vector<8x256xf32>
    %100 = arith.addf %97, %99 : vector<8x256xf32>
    %101 = math.tanh %80 : vector<8x256xf32>
    %102 = vector.broadcast %68 : vector<8x1xf32> to vector<8x256xf32>
    %103 = arith.mulf %102, %101 : vector<8x256xf32>
    %104 = arith.addf %80, %103 : vector<8x256xf32>
    %105 = math.tanh %90 : vector<8x256xf32>
    %106 = vector.broadcast %69 : vector<8x1xf32> to vector<8x256xf32>
    %107 = arith.mulf %106, %105 : vector<8x256xf32>
    %108 = arith.addf %90, %107 : vector<8x256xf32>
    %109 = math.tanh %100 : vector<8x256xf32>
    %110 = vector.broadcast %70 : vector<8x1xf32> to vector<8x256xf32>
    %111 = arith.mulf %110, %109 : vector<8x256xf32>
    %112 = arith.addf %100, %111 : vector<8x256xf32>
    %113 = vector.broadcast %56 : vector<8x1xf32> to vector<8x256xf32>
    %114 = arith.mulf %113, %19 : vector<8x256xf32>
    %115 = vector.broadcast %65 : vector<8x1xf32> to vector<8x256xf32>
    %116 = arith.addf %115, %114 : vector<8x256xf32>
    %117 = vector.broadcast %57 : vector<8x1xf32> to vector<8x256xf32>
    %118 = arith.mulf %117, %37 : vector<8x256xf32>
    %119 = arith.addf %116, %118 : vector<8x256xf32>
    %120 = vector.broadcast %58 : vector<8x1xf32> to vector<8x256xf32>
    %121 = arith.mulf %120, %55 : vector<8x256xf32>
    %122 = arith.addf %119, %121 : vector<8x256xf32>
    %123 = vector.broadcast %59 : vector<8x1xf32> to vector<8x256xf32>
    %124 = arith.mulf %123, %19 : vector<8x256xf32>
    %125 = vector.broadcast %66 : vector<8x1xf32> to vector<8x256xf32>
    %126 = arith.addf %125, %124 : vector<8x256xf32>
    %127 = vector.broadcast %60 : vector<8x1xf32> to vector<8x256xf32>
    %128 = arith.mulf %127, %37 : vector<8x256xf32>
    %129 = arith.addf %126, %128 : vector<8x256xf32>
    %130 = vector.broadcast %61 : vector<8x1xf32> to vector<8x256xf32>
    %131 = arith.mulf %130, %55 : vector<8x256xf32>
    %132 = arith.addf %129, %131 : vector<8x256xf32>
    %133 = vector.broadcast %62 : vector<8x1xf32> to vector<8x256xf32>
    %134 = arith.mulf %133, %19 : vector<8x256xf32>
    %135 = vector.broadcast %67 : vector<8x1xf32> to vector<8x256xf32>
    %136 = arith.addf %135, %134 : vector<8x256xf32>
    %137 = vector.broadcast %63 : vector<8x1xf32> to vector<8x256xf32>
    %138 = arith.mulf %137, %37 : vector<8x256xf32>
    %139 = arith.addf %136, %138 : vector<8x256xf32>
    %140 = vector.broadcast %64 : vector<8x1xf32> to vector<8x256xf32>
    %141 = arith.mulf %140, %55 : vector<8x256xf32>
    %142 = arith.addf %139, %141 : vector<8x256xf32>
    %143 = math.tanh %122 : vector<8x256xf32>
    %144 = vector.broadcast %68 : vector<8x1xf32> to vector<8x256xf32>
    %145 = arith.mulf %144, %143 : vector<8x256xf32>
    %146 = arith.addf %122, %145 : vector<8x256xf32>
    %147 = math.tanh %132 : vector<8x256xf32>
    %148 = vector.broadcast %69 : vector<8x1xf32> to vector<8x256xf32>
    %149 = arith.mulf %148, %147 : vector<8x256xf32>
    %150 = arith.addf %132, %149 : vector<8x256xf32>
    %151 = math.tanh %142 : vector<8x256xf32>
    %152 = vector.broadcast %70 : vector<8x1xf32> to vector<8x256xf32>
    %153 = arith.mulf %152, %151 : vector<8x256xf32>
    %154 = arith.addf %142, %153 : vector<8x256xf32>
    %155 = vector.extract_strided_slice %1 {offsets = [0, 27], sizes = [8, 1], strides = [1, 1]} : vector<8x61xf32> to vector<8x1xf32>
    %156 = vector.extract_strided_slice %1 {offsets = [0, 28], sizes = [8, 1], strides = [1, 1]} : vector<8x61xf32> to vector<8x1xf32>
    %157 = vector.extract_strided_slice %1 {offsets = [0, 29], sizes = [8, 1], strides = [1, 1]} : vector<8x61xf32> to vector<8x1xf32>
    %158 = vector.extract_strided_slice %1 {offsets = [0, 30], sizes = [8, 1], strides = [1, 1]} : vector<8x61xf32> to vector<8x1xf32>
    %159 = vector.extract_strided_slice %1 {offsets = [0, 31], sizes = [8, 1], strides = [1, 1]} : vector<8x61xf32> to vector<8x1xf32>
    %160 = vector.extract_strided_slice %1 {offsets = [0, 32], sizes = [8, 1], strides = [1, 1]} : vector<8x61xf32> to vector<8x1xf32>
    %161 = vector.extract_strided_slice %1 {offsets = [0, 33], sizes = [8, 1], strides = [1, 1]} : vector<8x61xf32> to vector<8x1xf32>
    %162 = vector.extract_strided_slice %1 {offsets = [0, 34], sizes = [8, 1], strides = [1, 1]} : vector<8x61xf32> to vector<8x1xf32>
    %163 = vector.extract_strided_slice %1 {offsets = [0, 35], sizes = [8, 1], strides = [1, 1]} : vector<8x61xf32> to vector<8x1xf32>
    %164 = vector.extract_strided_slice %1 {offsets = [0, 36], sizes = [8, 1], strides = [1, 1]} : vector<8x61xf32> to vector<8x1xf32>
    %165 = vector.extract_strided_slice %1 {offsets = [0, 37], sizes = [8, 1], strides = [1, 1]} : vector<8x61xf32> to vector<8x1xf32>
    %166 = vector.extract_strided_slice %1 {offsets = [0, 38], sizes = [8, 1], strides = [1, 1]} : vector<8x61xf32> to vector<8x1xf32>
    %167 = vector.extract_strided_slice %1 {offsets = [0, 39], sizes = [8, 1], strides = [1, 1]} : vector<8x61xf32> to vector<8x1xf32>
    %168 = vector.extract_strided_slice %1 {offsets = [0, 40], sizes = [8, 1], strides = [1, 1]} : vector<8x61xf32> to vector<8x1xf32>
    %169 = vector.extract_strided_slice %1 {offsets = [0, 41], sizes = [8, 1], strides = [1, 1]} : vector<8x61xf32> to vector<8x1xf32>
    %170 = vector.broadcast %155 : vector<8x1xf32> to vector<8x256xf32>
    %171 = arith.mulf %170, %104 : vector<8x256xf32>
    %172 = vector.broadcast %164 : vector<8x1xf32> to vector<8x256xf32>
    %173 = arith.addf %172, %171 : vector<8x256xf32>
    %174 = vector.broadcast %156 : vector<8x1xf32> to vector<8x256xf32>
    %175 = arith.mulf %174, %108 : vector<8x256xf32>
    %176 = arith.addf %173, %175 : vector<8x256xf32>
    %177 = vector.broadcast %157 : vector<8x1xf32> to vector<8x256xf32>
    %178 = arith.mulf %177, %112 : vector<8x256xf32>
    %179 = arith.addf %176, %178 : vector<8x256xf32>
    %180 = vector.broadcast %158 : vector<8x1xf32> to vector<8x256xf32>
    %181 = arith.mulf %180, %104 : vector<8x256xf32>
    %182 = vector.broadcast %165 : vector<8x1xf32> to vector<8x256xf32>
    %183 = arith.addf %182, %181 : vector<8x256xf32>
    %184 = vector.broadcast %159 : vector<8x1xf32> to vector<8x256xf32>
    %185 = arith.mulf %184, %108 : vector<8x256xf32>
    %186 = arith.addf %183, %185 : vector<8x256xf32>
    %187 = vector.broadcast %160 : vector<8x1xf32> to vector<8x256xf32>
    %188 = arith.mulf %187, %112 : vector<8x256xf32>
    %189 = arith.addf %186, %188 : vector<8x256xf32>
    %190 = vector.broadcast %161 : vector<8x1xf32> to vector<8x256xf32>
    %191 = arith.mulf %190, %104 : vector<8x256xf32>
    %192 = vector.broadcast %166 : vector<8x1xf32> to vector<8x256xf32>
    %193 = arith.addf %192, %191 : vector<8x256xf32>
    %194 = vector.broadcast %162 : vector<8x1xf32> to vector<8x256xf32>
    %195 = arith.mulf %194, %108 : vector<8x256xf32>
    %196 = arith.addf %193, %195 : vector<8x256xf32>
    %197 = vector.broadcast %163 : vector<8x1xf32> to vector<8x256xf32>
    %198 = arith.mulf %197, %112 : vector<8x256xf32>
    %199 = arith.addf %196, %198 : vector<8x256xf32>
    %200 = math.tanh %179 : vector<8x256xf32>
    %201 = vector.broadcast %167 : vector<8x1xf32> to vector<8x256xf32>
    %202 = arith.mulf %201, %200 : vector<8x256xf32>
    %203 = arith.addf %179, %202 : vector<8x256xf32>
    %204 = math.tanh %189 : vector<8x256xf32>
    %205 = vector.broadcast %168 : vector<8x1xf32> to vector<8x256xf32>
    %206 = arith.mulf %205, %204 : vector<8x256xf32>
    %207 = arith.addf %189, %206 : vector<8x256xf32>
    %208 = math.tanh %199 : vector<8x256xf32>
    %209 = vector.broadcast %169 : vector<8x1xf32> to vector<8x256xf32>
    %210 = arith.mulf %209, %208 : vector<8x256xf32>
    %211 = arith.addf %199, %210 : vector<8x256xf32>
    %212 = vector.broadcast %155 : vector<8x1xf32> to vector<8x256xf32>
    %213 = arith.mulf %212, %146 : vector<8x256xf32>
    %214 = vector.broadcast %164 : vector<8x1xf32> to vector<8x256xf32>
    %215 = arith.addf %214, %213 : vector<8x256xf32>
    %216 = vector.broadcast %156 : vector<8x1xf32> to vector<8x256xf32>
    %217 = arith.mulf %216, %150 : vector<8x256xf32>
    %218 = arith.addf %215, %217 : vector<8x256xf32>
    %219 = vector.broadcast %157 : vector<8x1xf32> to vector<8x256xf32>
    %220 = arith.mulf %219, %154 : vector<8x256xf32>
    %221 = arith.addf %218, %220 : vector<8x256xf32>
    %222 = vector.broadcast %158 : vector<8x1xf32> to vector<8x256xf32>
    %223 = arith.mulf %222, %146 : vector<8x256xf32>
    %224 = vector.broadcast %165 : vector<8x1xf32> to vector<8x256xf32>
    %225 = arith.addf %224, %223 : vector<8x256xf32>
    %226 = vector.broadcast %159 : vector<8x1xf32> to vector<8x256xf32>
    %227 = arith.mulf %226, %150 : vector<8x256xf32>
    %228 = arith.addf %225, %227 : vector<8x256xf32>
    %229 = vector.broadcast %160 : vector<8x1xf32> to vector<8x256xf32>
    %230 = arith.mulf %229, %154 : vector<8x256xf32>
    %231 = arith.addf %228, %230 : vector<8x256xf32>
    %232 = vector.broadcast %161 : vector<8x1xf32> to vector<8x256xf32>
    %233 = arith.mulf %232, %146 : vector<8x256xf32>
    %234 = vector.broadcast %166 : vector<8x1xf32> to vector<8x256xf32>
    %235 = arith.addf %234, %233 : vector<8x256xf32>
    %236 = vector.broadcast %162 : vector<8x1xf32> to vector<8x256xf32>
    %237 = arith.mulf %236, %150 : vector<8x256xf32>
    %238 = arith.addf %235, %237 : vector<8x256xf32>
    %239 = vector.broadcast %163 : vector<8x1xf32> to vector<8x256xf32>
    %240 = arith.mulf %239, %154 : vector<8x256xf32>
    %241 = arith.addf %238, %240 : vector<8x256xf32>
    %242 = math.tanh %221 : vector<8x256xf32>
    %243 = vector.broadcast %167 : vector<8x1xf32> to vector<8x256xf32>
    %244 = arith.mulf %243, %242 : vector<8x256xf32>
    %245 = arith.addf %221, %244 : vector<8x256xf32>
    %246 = math.tanh %231 : vector<8x256xf32>
    %247 = vector.broadcast %168 : vector<8x1xf32> to vector<8x256xf32>
    %248 = arith.mulf %247, %246 : vector<8x256xf32>
    %249 = arith.addf %231, %248 : vector<8x256xf32>
    %250 = math.tanh %241 : vector<8x256xf32>
    %251 = vector.broadcast %169 : vector<8x1xf32> to vector<8x256xf32>
    %252 = arith.mulf %251, %250 : vector<8x256xf32>
    %253 = arith.addf %241, %252 : vector<8x256xf32>
    %254 = vector.extract_strided_slice %1 {offsets = [0, 42], sizes = [8, 1], strides = [1, 1]} : vector<8x61xf32> to vector<8x1xf32>
    %255 = vector.extract_strided_slice %1 {offsets = [0, 43], sizes = [8, 1], strides = [1, 1]} : vector<8x61xf32> to vector<8x1xf32>
    %256 = vector.extract_strided_slice %1 {offsets = [0, 44], sizes = [8, 1], strides = [1, 1]} : vector<8x61xf32> to vector<8x1xf32>
    %257 = vector.extract_strided_slice %1 {offsets = [0, 45], sizes = [8, 1], strides = [1, 1]} : vector<8x61xf32> to vector<8x1xf32>
    %258 = vector.extract_strided_slice %1 {offsets = [0, 46], sizes = [8, 1], strides = [1, 1]} : vector<8x61xf32> to vector<8x1xf32>
    %259 = vector.extract_strided_slice %1 {offsets = [0, 47], sizes = [8, 1], strides = [1, 1]} : vector<8x61xf32> to vector<8x1xf32>
    %260 = vector.extract_strided_slice %1 {offsets = [0, 48], sizes = [8, 1], strides = [1, 1]} : vector<8x61xf32> to vector<8x1xf32>
    %261 = vector.extract_strided_slice %1 {offsets = [0, 49], sizes = [8, 1], strides = [1, 1]} : vector<8x61xf32> to vector<8x1xf32>
    %262 = vector.extract_strided_slice %1 {offsets = [0, 50], sizes = [8, 1], strides = [1, 1]} : vector<8x61xf32> to vector<8x1xf32>
    %263 = vector.extract_strided_slice %1 {offsets = [0, 51], sizes = [8, 1], strides = [1, 1]} : vector<8x61xf32> to vector<8x1xf32>
    %264 = vector.extract_strided_slice %1 {offsets = [0, 52], sizes = [8, 1], strides = [1, 1]} : vector<8x61xf32> to vector<8x1xf32>
    %265 = vector.extract_strided_slice %1 {offsets = [0, 53], sizes = [8, 1], strides = [1, 1]} : vector<8x61xf32> to vector<8x1xf32>
    %266 = vector.extract_strided_slice %1 {offsets = [0, 54], sizes = [8, 1], strides = [1, 1]} : vector<8x61xf32> to vector<8x1xf32>
    %267 = vector.extract_strided_slice %1 {offsets = [0, 55], sizes = [8, 1], strides = [1, 1]} : vector<8x61xf32> to vector<8x1xf32>
    %268 = vector.extract_strided_slice %1 {offsets = [0, 56], sizes = [8, 1], strides = [1, 1]} : vector<8x61xf32> to vector<8x1xf32>
    %269 = vector.broadcast %254 : vector<8x1xf32> to vector<8x256xf32>
    %270 = arith.mulf %269, %203 : vector<8x256xf32>
    %271 = vector.broadcast %263 : vector<8x1xf32> to vector<8x256xf32>
    %272 = arith.addf %271, %270 : vector<8x256xf32>
    %273 = vector.broadcast %255 : vector<8x1xf32> to vector<8x256xf32>
    %274 = arith.mulf %273, %207 : vector<8x256xf32>
    %275 = arith.addf %272, %274 : vector<8x256xf32>
    %276 = vector.broadcast %256 : vector<8x1xf32> to vector<8x256xf32>
    %277 = arith.mulf %276, %211 : vector<8x256xf32>
    %278 = arith.addf %275, %277 : vector<8x256xf32>
    %279 = vector.broadcast %257 : vector<8x1xf32> to vector<8x256xf32>
    %280 = arith.mulf %279, %203 : vector<8x256xf32>
    %281 = vector.broadcast %264 : vector<8x1xf32> to vector<8x256xf32>
    %282 = arith.addf %281, %280 : vector<8x256xf32>
    %283 = vector.broadcast %258 : vector<8x1xf32> to vector<8x256xf32>
    %284 = arith.mulf %283, %207 : vector<8x256xf32>
    %285 = arith.addf %282, %284 : vector<8x256xf32>
    %286 = vector.broadcast %259 : vector<8x1xf32> to vector<8x256xf32>
    %287 = arith.mulf %286, %211 : vector<8x256xf32>
    %288 = arith.addf %285, %287 : vector<8x256xf32>
    %289 = vector.broadcast %260 : vector<8x1xf32> to vector<8x256xf32>
    %290 = arith.mulf %289, %203 : vector<8x256xf32>
    %291 = vector.broadcast %265 : vector<8x1xf32> to vector<8x256xf32>
    %292 = arith.addf %291, %290 : vector<8x256xf32>
    %293 = vector.broadcast %261 : vector<8x1xf32> to vector<8x256xf32>
    %294 = arith.mulf %293, %207 : vector<8x256xf32>
    %295 = arith.addf %292, %294 : vector<8x256xf32>
    %296 = vector.broadcast %262 : vector<8x1xf32> to vector<8x256xf32>
    %297 = arith.mulf %296, %211 : vector<8x256xf32>
    %298 = arith.addf %295, %297 : vector<8x256xf32>
    %299 = math.tanh %278 : vector<8x256xf32>
    %300 = vector.broadcast %266 : vector<8x1xf32> to vector<8x256xf32>
    %301 = arith.mulf %300, %299 : vector<8x256xf32>
    %302 = arith.addf %278, %301 : vector<8x256xf32>
    %303 = math.tanh %288 : vector<8x256xf32>
    %304 = vector.broadcast %267 : vector<8x1xf32> to vector<8x256xf32>
    %305 = arith.mulf %304, %303 : vector<8x256xf32>
    %306 = arith.addf %288, %305 : vector<8x256xf32>
    %307 = math.tanh %298 : vector<8x256xf32>
    %308 = vector.broadcast %268 : vector<8x1xf32> to vector<8x256xf32>
    %309 = arith.mulf %308, %307 : vector<8x256xf32>
    %310 = arith.addf %298, %309 : vector<8x256xf32>
    %311 = vector.broadcast %254 : vector<8x1xf32> to vector<8x256xf32>
    %312 = arith.mulf %311, %245 : vector<8x256xf32>
    %313 = vector.broadcast %263 : vector<8x1xf32> to vector<8x256xf32>
    %314 = arith.addf %313, %312 : vector<8x256xf32>
    %315 = vector.broadcast %255 : vector<8x1xf32> to vector<8x256xf32>
    %316 = arith.mulf %315, %249 : vector<8x256xf32>
    %317 = arith.addf %314, %316 : vector<8x256xf32>
    %318 = vector.broadcast %256 : vector<8x1xf32> to vector<8x256xf32>
    %319 = arith.mulf %318, %253 : vector<8x256xf32>
    %320 = arith.addf %317, %319 : vector<8x256xf32>
    %321 = vector.broadcast %257 : vector<8x1xf32> to vector<8x256xf32>
    %322 = arith.mulf %321, %245 : vector<8x256xf32>
    %323 = vector.broadcast %264 : vector<8x1xf32> to vector<8x256xf32>
    %324 = arith.addf %323, %322 : vector<8x256xf32>
    %325 = vector.broadcast %258 : vector<8x1xf32> to vector<8x256xf32>
    %326 = arith.mulf %325, %249 : vector<8x256xf32>
    %327 = arith.addf %324, %326 : vector<8x256xf32>
    %328 = vector.broadcast %259 : vector<8x1xf32> to vector<8x256xf32>
    %329 = arith.mulf %328, %253 : vector<8x256xf32>
    %330 = arith.addf %327, %329 : vector<8x256xf32>
    %331 = vector.broadcast %260 : vector<8x1xf32> to vector<8x256xf32>
    %332 = arith.mulf %331, %245 : vector<8x256xf32>
    %333 = vector.broadcast %265 : vector<8x1xf32> to vector<8x256xf32>
    %334 = arith.addf %333, %332 : vector<8x256xf32>
    %335 = vector.broadcast %261 : vector<8x1xf32> to vector<8x256xf32>
    %336 = arith.mulf %335, %249 : vector<8x256xf32>
    %337 = arith.addf %334, %336 : vector<8x256xf32>
    %338 = vector.broadcast %262 : vector<8x1xf32> to vector<8x256xf32>
    %339 = arith.mulf %338, %253 : vector<8x256xf32>
    %340 = arith.addf %337, %339 : vector<8x256xf32>
    %341 = math.tanh %320 : vector<8x256xf32>
    %342 = vector.broadcast %266 : vector<8x1xf32> to vector<8x256xf32>
    %343 = arith.mulf %342, %341 : vector<8x256xf32>
    %344 = arith.addf %320, %343 : vector<8x256xf32>
    %345 = math.tanh %330 : vector<8x256xf32>
    %346 = vector.broadcast %267 : vector<8x1xf32> to vector<8x256xf32>
    %347 = arith.mulf %346, %345 : vector<8x256xf32>
    %348 = arith.addf %330, %347 : vector<8x256xf32>
    %349 = math.tanh %340 : vector<8x256xf32>
    %350 = vector.broadcast %268 : vector<8x1xf32> to vector<8x256xf32>
    %351 = arith.mulf %350, %349 : vector<8x256xf32>
    %352 = arith.addf %340, %351 : vector<8x256xf32>
    %353 = vector.extract_strided_slice %1 {offsets = [0, 57], sizes = [8, 1], strides = [1, 1]} : vector<8x61xf32> to vector<8x1xf32>
    %354 = vector.extract_strided_slice %1 {offsets = [0, 58], sizes = [8, 1], strides = [1, 1]} : vector<8x61xf32> to vector<8x1xf32>
    %355 = vector.extract_strided_slice %1 {offsets = [0, 59], sizes = [8, 1], strides = [1, 1]} : vector<8x61xf32> to vector<8x1xf32>
    %356 = vector.extract_strided_slice %1 {offsets = [0, 60], sizes = [8, 1], strides = [1, 1]} : vector<8x61xf32> to vector<8x1xf32>
    %357 = vector.broadcast %353 : vector<8x1xf32> to vector<8x256xf32>
    %358 = arith.mulf %357, %302 : vector<8x256xf32>
    %359 = vector.broadcast %356 : vector<8x1xf32> to vector<8x256xf32>
    %360 = arith.addf %359, %358 : vector<8x256xf32>
    %361 = vector.broadcast %354 : vector<8x1xf32> to vector<8x256xf32>
    %362 = arith.mulf %361, %306 : vector<8x256xf32>
    %363 = arith.addf %360, %362 : vector<8x256xf32>
    %364 = vector.broadcast %355 : vector<8x1xf32> to vector<8x256xf32>
    %365 = arith.mulf %364, %310 : vector<8x256xf32>
    %366 = arith.addf %363, %365 : vector<8x256xf32>
    %367 = vector.broadcast %353 : vector<8x1xf32> to vector<8x256xf32>
    %368 = arith.mulf %367, %344 : vector<8x256xf32>
    %369 = vector.broadcast %356 : vector<8x1xf32> to vector<8x256xf32>
    %370 = arith.addf %369, %368 : vector<8x256xf32>
    %371 = vector.broadcast %354 : vector<8x1xf32> to vector<8x256xf32>
    %372 = arith.mulf %371, %348 : vector<8x256xf32>
    %373 = arith.addf %370, %372 : vector<8x256xf32>
    %374 = vector.broadcast %355 : vector<8x1xf32> to vector<8x256xf32>
    %375 = arith.mulf %374, %352 : vector<8x256xf32>
    %376 = arith.addf %373, %375 : vector<8x256xf32>
    %cst = arith.constant 5.000000e-01 : f32
    %377 = vector.broadcast %cst : f32 to vector<8x256xf32>
    %378 = arith.mulf %377, %376 : vector<8x256xf32>
    %379 = math.tanh %378 : vector<8x256xf32>
    %cst_3 = arith.constant 5.000000e-01 : f32
    %380 = vector.broadcast %cst_3 : f32 to vector<8x256xf32>
    %381 = arith.mulf %380, %366 : vector<8x256xf32>
    %382 = math.tanh %381 : vector<8x256xf32>
    %383 = arith.subf %379, %382 : vector<8x256xf32>
    %cst_4 = arith.constant 5.000000e-01 : f32
    %384 = vector.broadcast %cst_4 : f32 to vector<8x256xf32>
    %385 = arith.mulf %384, %383 : vector<8x256xf32>
    %cst_5 = arith.constant 9.99999971E-10 : f32
    %386 = vector.broadcast %cst_5 : f32 to vector<8x256xf32>
    %387 = arith.maximumf %385, %386 : vector<8x256xf32>
    %c0_6 = arith.constant 0 : index
    %c0_7 = arith.constant 0 : index
    %388 = vector.load %arg4[%c0_6, %c0_7] : memref<8x256xf32, #tpu.memory_space<vmem>>, vector<8x256xf32>
    tpu.vector_store %arg4[%c0_6, %c0_7], %387 {strides = array<i32>} : memref<8x256xf32, #tpu.memory_space<vmem>>, vector<8x256xf32>,
    return
  }
  func.func @transform_0(%arg0: i32, %arg1: i32) -> (i32, i32) {
    %c0_i32 = arith.constant 0 : i32
    return %arg0, %arg1 : i32, i32
  }
  func.func @transform_1(%arg0: i32, %arg1: i32) -> (i32, i32) {
    %c0_i32 = arith.constant 0 : i32
    %c0_i32_0 = arith.constant 0 : i32
    return %arg0, %c0_i32 : i32, i32
  }
  func.func @transform_2(%arg0: i32, %arg1: i32) -> (i32, i32) {
    %c0_i32 = arith.constant 0 : i32
    return %arg0, %arg1 : i32, i32
  }
}

</mosaic_0001>

<llo_original>
// kernel: tpu_custom_call.1
$region0: #{tpu_custom_call.1}
  #allocation0 [shape = 'u32[]', space=smem, size = 0x4, offset = 0x4, fixed_abs, tag = 'smem constant byte address 0x4 - core index']
  #allocation1 [shape = 'u32[72,128]{1,0:T(1,128)}', space=vmem, size = 0x9000, scoped, tag = 'internal scratch']
  %s0 = inlined_call_operand.hbm [shape: f32[8,256], index: 0, kind: input, shape index: {}]
  %s1 = inlined_call_operand.hbm [shape: f32[8,61], index: 1, kind: input, shape index: {}]
  %s2 = inlined_call_operand.hbm [shape: f32[8,256], index: 2, kind: output, shape index: {}]
  %s3 = sld [smem:[#allocation0]]
  $region26: #{tpu_custom_call.1} parent=0
    _
  %s5 = ssub.s32 1, %s3
  %s6 = scalar_select 0, %s5, %s3
  $region1: #{tpu_custom_call.1} parent=0
    #allocation2 [shape = 'u8[8192]{0}', space=vmem, size = 0x2000, scoped, tag = 'input window, operand 0, single buffered']
    #allocation3 [shape = 's32[1]{0}', space=sflag, size = 0x4, scoped, tag = 'scoped memory for tpu_custom_call.1']
    #allocation4 [shape = 's32[1]{0}', space=sflag, size = 0x4, scoped, tag = 'scoped memory for tpu_custom_call.1']
    #allocation5 [shape = 'u8[4096]{0}', space=vmem, size = 0x1000, scoped, tag = 'input window, operand 1, single buffered']
    #allocation6 [shape = 's32[1]{0}', space=sflag, size = 0x4, scoped, tag = 'scoped memory for tpu_custom_call.1']
    #allocation7 [shape = 'u8[8192]{0}', space=vmem, size = 0x2000, scoped, tag = 'output window, operand 0, single buffered']
    %7 = vsyncpa [#allocation3], 0
    %8 = vsyncpa [#allocation6], 0
    %9 = vsyncpa [#allocation4], 0
    // Predicated region
    $region2: #{tpu_custom_call.1} parent=1 // pred_check
      _
    $region3: #{tpu_custom_call.1} parent=1 // pred_check_branch
      %11 = sbr.rel (0) target = $region5
    $region4: #{tpu_custom_call.1} parent=1 // pred_region
      %13 = vsyncadd [#allocation3], 0
      %s15 = sshll.u32 %s0, 4
      %s16 = int_to_ptr.hbm [resolvable:$true] %s15
      %s17 = sshll.u32 [#allocation2], 4
      %s18 = int_to_ptr.vmem [resolvable:$true] %s17
      %20 = dma.hbm_to_vmem [thread:$0]  %s16, 256, %s18, [#allocation3]
    $region5: #{tpu_custom_call.1} parent=1 // pred_fallthru
      _
    // Predicated region
    $region6: #{tpu_custom_call.1} parent=1 // pred_check
      _
    $region7: #{tpu_custom_call.1} parent=1 // pred_check_branch
      %22 = sbr.rel (0) target = $region9
    $region8: #{tpu_custom_call.1} parent=1 // pred_region
      %24 = vsyncadd [#allocation6], 0
      %s26 = sshll.u32 %s1, 4
      %s27 = int_to_ptr.hbm [resolvable:$true] %s26
      %s28 = sshll.u32 [#allocation5], 4
      %s29 = int_to_ptr.vmem [resolvable:$true] %s28
      %31 = dma.hbm_to_vmem [thread:$0]  %s27, 128, %s29, [#allocation6]
    $region9: #{tpu_custom_call.1} parent=1 // pred_fallthru
      _
    // Predicated region
    $region10: #{tpu_custom_call.1} parent=1 // pred_check
      _
    $region11: #{tpu_custom_call.1} parent=1 // pred_check_branch
      %33 = sbr.rel (0) target = $region13
    $region12: #{tpu_custom_call.1} parent=1 // pred_region
      %35 = dma.done [#allocation3], 256
    $region13: #{tpu_custom_call.1} parent=1 // pred_fallthru
      _
    // Predicated region
    $region14: #{tpu_custom_call.1} parent=1 // pred_check
      _
    $region15: #{tpu_custom_call.1} parent=1 // pred_check_branch
      %37 = sbr.rel (0) target = $region17
    $region16: #{tpu_custom_call.1} parent=1 // pred_region
      %39 = dma.done [#allocation6], 128
    $region17: #{tpu_custom_call.1} parent=1 // pred_fallthru
      _
    %v40 = vld [vmem:[#allocation2] sm:$0xff]
    %v41 = vld [vmem:[#allocation2 + $0x8] sm:$0xff]
    %v42 = vld [vmem:[#allocation5] sm:$0xff]
    %44 = vset.pattern.permute.xlu0 0
    %45 = vperm.xlu0 %44, %v42
    %v46 = vpop.permute.xlu0 %45
    %v48 = vmul.f32 %v46, %v40
    %v49 = vmul.f32 %v46, %v41
    %50 = vset.pattern.permute.xlu0 3
    %51 = vperm.xlu0 %50, %v42
    %v52 = vpop.permute.xlu0 %51
    %v54 = vadd.f32 %v48, %v52
    %v55 = vadd.f32 %v49, %v52
    %56 = vset.pattern.permute.xlu0 6
    %57 = vperm.xlu0 %56, %v42
    %v58 = vpop.permute.xlu0 %57
    %v60 = vadd.f32 %v48, %v58
    %v61 = vadd.f32 %v49, %v58
    %v62 = vtanh.pop %v54
    %v63 = vtanh.pop %v55
    %64 = vset.pattern.permute.xlu0 9
    %65 = vperm.xlu0 %64, %v42
    %v66 = vpop.permute.xlu0 %65
    %v68 = vmul.f32 %v66, %v62
    %v69 = vmul.f32 %v66, %v63
    %v70 = vadd.f32 %v54, %v68
    %v71 = vadd.f32 %v55, %v69
    %v72 = vtanh.pop %v60
    %v73 = vtanh.pop %v61
    %v74 = vmul.f32 %v66, %v72
    %v75 = vmul.f32 %v66, %v73
    %v76 = vadd.f32 %v60, %v74
    %v77 = vadd.f32 %v61, %v75
    %78 = vset.pattern.permute.xlu0 1
    %79 = vperm.xlu0 %78, %v42
    %v80 = vpop.permute.xlu0 %79
    %v82 = vmul.f32 %v80, %v40
    %v83 = vmul.f32 %v80, %v41
    %84 = vset.pattern.permute.xlu0 4
    %85 = vperm.xlu0 %84, %v42
    %v86 = vpop.permute.xlu0 %85
    %v88 = vadd.f32 %v82, %v86
    %v89 = vadd.f32 %v83, %v86
    %90 = vset.pattern.permute.xlu0 7
    %91 = vperm.xlu0 %90, %v42
    %v92 = vpop.permute.xlu0 %91
    %v94 = vadd.f32 %v82, %v92
    %v95 = vadd.f32 %v83, %v92
    %v96 = vtanh.pop %v88
    %v97 = vtanh.pop %v89
    %98 = vset.pattern.permute.xlu0 10
    %99 = vperm.xlu0 %98, %v42
    %v100 = vpop.permute.xlu0 %99
    %v102 = vmul.f32 %v100, %v96
    %v103 = vmul.f32 %v100, %v97
    %v104 = vadd.f32 %v88, %v102
    %v105 = vadd.f32 %v89, %v103
    %v106 = vtanh.pop %v94
    %v107 = vtanh.pop %v95
    %v108 = vmul.f32 %v100, %v106
    %v109 = vmul.f32 %v100, %v107
    %v110 = vadd.f32 %v94, %v108
    %v111 = vadd.f32 %v95, %v109
    %112 = vset.pattern.permute.xlu0 2
    %113 = vperm.xlu0 %112, %v42
    %v114 = vpop.permute.xlu0 %113
    %v116 = vmul.f32 %v114, %v40
    %v117 = vmul.f32 %v114, %v41
    %118 = vset.pattern.permute.xlu0 5
    %119 = vperm.xlu0 %118, %v42
    %v120 = vpop.permute.xlu0 %119
    %v122 = vadd.f32 %v116, %v120
    %v123 = vadd.f32 %v117, %v120
    %124 = vset.pattern.permute.xlu0 8
    %125 = vperm.xlu0 %124, %v42
    %v126 = vpop.permute.xlu0 %125
    %v128 = vadd.f32 %v116, %v126
    %v129 = vadd.f32 %v117, %v126
    %v130 = vtanh.pop %v122
    %v131 = vtanh.pop %v123
    %132 = vset.pattern.permute.xlu0 11
    %133 = vperm.xlu0 %132, %v42
    %v134 = vpop.permute.xlu0 %133
    %v136 = vmul.f32 %v134, %v130
    %v137 = vmul.f32 %v134, %v131
    %v138 = vadd.f32 %v122, %v136
    %v139 = vadd.f32 %v123, %v137
    %v140 = vtanh.pop %v128
    %v141 = vtanh.pop %v129
    %v142 = vmul.f32 %v134, %v140
    %v143 = vmul.f32 %v134, %v141
    %v144 = vadd.f32 %v128, %v142
    %v145 = vadd.f32 %v129, %v143
    %146 = vset.pattern.permute.xlu0 12
    %147 = vperm.xlu0 %146, %v42
    %v148 = vpop.permute.xlu0 %147
    %v150 = vmul.f32 %v148, %v70
    %v151 = vmul.f32 %v148, %v71
    %152 = vset.pattern.permute.xlu0 21
    %153 = vperm.xlu0 %152, %v42
    %v154 = vpop.permute.xlu0 %153
    %v156 = vadd.f32 %v154, %v150
    %v157 = vadd.f32 %v154, %v151
    %158 = vset.pattern.permute.xlu0 13
    %159 = vperm.xlu0 %158, %v42
    %v160 = vpop.permute.xlu0 %159
    %v162 = vmul.f32 %v160, %v104
    %v163 = vmul.f32 %v160, %v105
    %v164 = vadd.f32 %v156, %v162
    %v165 = vadd.f32 %v157, %v163
    %166 = vset.pattern.permute.xlu0 14
    %167 = vperm.xlu0 %166, %v42
    %v168 = vpop.permute.xlu0 %167
    %v170 = vmul.f32 %v168, %v138
    %v171 = vmul.f32 %v168, %v139
    %v172 = vadd.f32 %v164, %v170
    %v173 = vadd.f32 %v165, %v171
    %174 = vset.pattern.permute.xlu0 15
    %175 = vperm.xlu0 %174, %v42
    %v176 = vpop.permute.xlu0 %175
    %v178 = vmul.f32 %v176, %v70
    %v179 = vmul.f32 %v176, %v71
    %180 = vset.pattern.permute.xlu0 22
    %181 = vperm.xlu0 %180, %v42
    %v182 = vpop.permute.xlu0 %181
    %v184 = vadd.f32 %v182, %v178
    %v185 = vadd.f32 %v182, %v179
    %186 = vset.pattern.permute.xlu0 16
    %187 = vperm.xlu0 %186, %v42
    %v188 = vpop.permute.xlu0 %187
    %v190 = vmul.f32 %v188, %v104
    %v191 = vmul.f32 %v188, %v105
    %v192 = vadd.f32 %v184, %v190
    %v193 = vadd.f32 %v185, %v191
    %194 = vset.pattern.permute.xlu0 17
    %195 = vperm.xlu0 %194, %v42
    %v196 = vpop.permute.xlu0 %195
    %v198 = vmul.f32 %v196, %v138
    %v199 = vmul.f32 %v196, %v139
    %v200 = vadd.f32 %v192, %v198
    %v201 = vadd.f32 %v193, %v199
    %202 = vset.pattern.permute.xlu0 18
    %203 = vperm.xlu0 %202, %v42
    %v204 = vpop.permute.xlu0 %203
    %v206 = vmul.f32 %v204, %v70
    %v207 = vmul.f32 %v204, %v71
    %208 = vset.pattern.permute.xlu0 23
    %209 = vperm.xlu0 %208, %v42
    %v210 = vpop.permute.xlu0 %209
    %v212 = vadd.f32 %v210, %v206
    %v213 = vadd.f32 %v210, %v207
    %214 = vset.pattern.permute.xlu0 19
    %215 = vperm.xlu0 %214, %v42
    %v216 = vpop.permute.xlu0 %215
    %v218 = vmul.f32 %v216, %v104
    %v219 = vmul.f32 %v216, %v105
    %v220 = vadd.f32 %v212, %v218
    %v221 = vadd.f32 %v213, %v219
    %222 = vset.pattern.permute.xlu0 20
    %223 = vperm.xlu0 %222, %v42
    %v224 = vpop.permute.xlu0 %223
    %v226 = vmul.f32 %v224, %v138
    %v227 = vmul.f32 %v224, %v139
    %v228 = vadd.f32 %v220, %v226
    %v229 = vadd.f32 %v221, %v227
    %v230 = vtanh.pop %v172
    %v231 = vtanh.pop %v173
    %232 = vset.pattern.permute.xlu0 24
    %233 = vperm.xlu0 %232, %v42
    %v234 = vpop.permute.xlu0 %233
    %v236 = vmul.f32 %v234, %v230
    %v237 = vmul.f32 %v234, %v231
    %v238 = vadd.f32 %v172, %v236
    %v239 = vadd.f32 %v173, %v237
    %v240 = vtanh.pop %v200
    %v241 = vtanh.pop %v201
    %242 = vset.pattern.permute.xlu0 25
    %243 = vperm.xlu0 %242, %v42
    %v244 = vpop.permute.xlu0 %243
    %v246 = vmul.f32 %v244, %v240
    %v247 = vmul.f32 %v244, %v241
    %v248 = vadd.f32 %v200, %v246
    %v249 = vadd.f32 %v201, %v247
    %v250 = vtanh.pop %v228
    %v251 = vtanh.pop %v229
    %252 = vset.pattern.permute.xlu0 26
    %253 = vperm.xlu0 %252, %v42
    %v254 = vpop.permute.xlu0 %253
    %v256 = vmul.f32 %v254, %v250
    %v257 = vmul.f32 %v254, %v251
    %v258 = vadd.f32 %v228, %v256
    %v259 = vadd.f32 %v229, %v257
    %v260 = vmul.f32 %v148, %v76
    %v261 = vmul.f32 %v148, %v77
    %v262 = vadd.f32 %v154, %v260
    %v263 = vadd.f32 %v154, %v261
    %v264 = vmul.f32 %v160, %v110
    %v265 = vmul.f32 %v160, %v111
    %v266 = vadd.f32 %v262, %v264
    %v267 = vadd.f32 %v263, %v265
    %v268 = vmul.f32 %v168, %v144
    %v269 = vmul.f32 %v168, %v145
    %v270 = vadd.f32 %v266, %v268
    %v271 = vadd.f32 %v267, %v269
    %v272 = vmul.f32 %v176, %v76
    %v273 = vmul.f32 %v176, %v77
    %v274 = vadd.f32 %v182, %v272
    %v275 = vadd.f32 %v182, %v273
    %v276 = vmul.f32 %v188, %v110
    %v277 = vmul.f32 %v188, %v111
    %v278 = vadd.f32 %v274, %v276
    %v279 = vadd.f32 %v275, %v277
    %v280 = vmul.f32 %v196, %v144
    %v281 = vmul.f32 %v196, %v145
    %v282 = vadd.f32 %v278, %v280
    %v283 = vadd.f32 %v279, %v281
    %v284 = vmul.f32 %v204, %v76
    %v285 = vmul.f32 %v204, %v77
    %v286 = vadd.f32 %v210, %v284
    %v287 = vadd.f32 %v210, %v285
    %v288 = vmul.f32 %v216, %v110
    %v289 = vmul.f32 %v216, %v111
    %v290 = vadd.f32 %v286, %v288
    %v291 = vadd.f32 %v287, %v289
    %v292 = vmul.f32 %v224, %v144
    %v293 = vmul.f32 %v224, %v145
    %v294 = vadd.f32 %v290, %v292
    %v295 = vadd.f32 %v291, %v293
    %v296 = vtanh.pop %v270
    %v297 = vtanh.pop %v271
    %v298 = vmul.f32 %v234, %v296
    %v299 = vmul.f32 %v234, %v297
    %v300 = vadd.f32 %v270, %v298
    %v301 = vadd.f32 %v271, %v299
    %v302 = vtanh.pop %v282
    %v303 = vtanh.pop %v283
    %v304 = vmul.f32 %v244, %v302
    %v305 = vmul.f32 %v244, %v303
    %v306 = vadd.f32 %v282, %v304
    %v307 = vadd.f32 %v283, %v305
    %v308 = vtanh.pop %v294
    %v309 = vtanh.pop %v295
    %v310 = vmul.f32 %v254, %v308
    %v311 = vmul.f32 %v254, %v309
    %v312 = vadd.f32 %v294, %v310
    %v313 = vadd.f32 %v295, %v311
    %314 = vset.pattern.permute.xlu0 27
    %315 = vperm.xlu0 %314, %v42
    %v316 = vpop.permute.xlu0 %315
    %v318 = vmul.f32 %v316, %v238
    %v319 = vmul.f32 %v316, %v239
    %320 = vset.pattern.permute.xlu0 36
    %321 = vperm.xlu0 %320, %v42
    %v322 = vpop.permute.xlu0 %321
    %v324 = vadd.f32 %v322, %v318
    %v325 = vadd.f32 %v322, %v319
    %326 = vset.pattern.permute.xlu0 28
    %327 = vperm.xlu0 %326, %v42
    %v328 = vpop.permute.xlu0 %327
    %v330 = vmul.f32 %v328, %v248
    %v331 = vmul.f32 %v328, %v249
    %v332 = vadd.f32 %v324, %v330
    %v333 = vadd.f32 %v325, %v331
    %334 = vset.pattern.permute.xlu0 29
    %335 = vperm.xlu0 %334, %v42
    %v336 = vpop.permute.xlu0 %335
    %v338 = vmul.f32 %v336, %v258
    %v339 = vmul.f32 %v336, %v259
    %v340 = vadd.f32 %v332, %v338
    %v341 = vadd.f32 %v333, %v339
    %342 = vset.pattern.permute.xlu0 30
    %343 = vperm.xlu0 %342, %v42
    %v344 = vpop.permute.xlu0 %343
    %v346 = vmul.f32 %v344, %v238
    %v347 = vmul.f32 %v344, %v239
    %348 = vset.pattern.permute.xlu0 37
    %349 = vperm.xlu0 %348, %v42
    %v350 = vpop.permute.xlu0 %349
    %v352 = vadd.f32 %v350, %v346
    %v353 = vadd.f32 %v350, %v347
    %354 = vset.pattern.permute.xlu0 31
    %355 = vperm.xlu0 %354, %v42
    %v356 = vpop.permute.xlu0 %355
    %v358 = vmul.f32 %v356, %v248
    %v359 = vmul.f32 %v356, %v249
    %v360 = vadd.f32 %v352, %v358
    %v361 = vadd.f32 %v353, %v359
    %362 = vset.pattern.permute.xlu0 32
    %363 = vperm.xlu0 %362, %v42
    %v364 = vpop.permute.xlu0 %363
    %v366 = vmul.f32 %v364, %v258
    %v367 = vmul.f32 %v364, %v259
    %v368 = vadd.f32 %v360, %v366
    %v369 = vadd.f32 %v361, %v367
    %370 = vset.pattern.permute.xlu0 33
    %371 = vperm.xlu0 %370, %v42
    %v372 = vpop.permute.xlu0 %371
    %v374 = vmul.f32 %v372, %v238
    %v375 = vmul.f32 %v372, %v239
    %376 = vset.pattern.permute.xlu0 38
    %377 = vperm.xlu0 %376, %v42
    %v378 = vpop.permute.xlu0 %377
    %v380 = vadd.f32 %v378, %v374
    %v381 = vadd.f32 %v378, %v375
    %382 = vset.pattern.permute.xlu0 34
    %383 = vperm.xlu0 %382, %v42
    %v384 = vpop.permute.xlu0 %383
    %v386 = vmul.f32 %v384, %v248
    %v387 = vmul.f32 %v384, %v249
    %v388 = vadd.f32 %v380, %v386
    %v389 = vadd.f32 %v381, %v387
    %390 = vset.pattern.permute.xlu0 35
    %391 = vperm.xlu0 %390, %v42
    %v392 = vpop.permute.xlu0 %391
    %v394 = vmul.f32 %v392, %v258
    %v395 = vmul.f32 %v392, %v259
    %v396 = vadd.f32 %v388, %v394
    %v397 = vadd.f32 %v389, %v395
    %v398 = vtanh.pop %v340
    %v399 = vtanh.pop %v341
    %400 = vset.pattern.permute.xlu0 39
    %401 = vperm.xlu0 %400, %v42
    %v402 = vpop.permute.xlu0 %401
    %v404 = vmul.f32 %v402, %v398
    %v405 = vmul.f32 %v402, %v399
    %v406 = vadd.f32 %v340, %v404
    %v407 = vadd.f32 %v341, %v405
    %v408 = vtanh.pop %v368
    %v409 = vtanh.pop %v369
    %410 = vset.pattern.permute.xlu0 40
    %411 = vperm.xlu0 %410, %v42
    %v412 = vpop.permute.xlu0 %411
    %v414 = vmul.f32 %v412, %v408
    %v415 = vmul.f32 %v412, %v409
    %v416 = vadd.f32 %v368, %v414
    %v417 = vadd.f32 %v369, %v415
    %v418 = vtanh.pop %v396
    %v419 = vtanh.pop %v397
    %420 = vset.pattern.permute.xlu0 41
    %421 = vperm.xlu0 %420, %v42
    %v422 = vpop.permute.xlu0 %421
    %v424 = vmul.f32 %v422, %v418
    %v425 = vmul.f32 %v422, %v419
    %v426 = vadd.f32 %v396, %v424
    %v427 = vadd.f32 %v397, %v425
    %v428 = vmul.f32 %v316, %v300
    %v429 = vmul.f32 %v316, %v301
    %v430 = vadd.f32 %v322, %v428
    %v431 = vadd.f32 %v322, %v429
    %v432 = vmul.f32 %v328, %v306
    %v433 = vmul.f32 %v328, %v307
    %v434 = vadd.f32 %v430, %v432
    %v435 = vadd.f32 %v431, %v433
    %v436 = vmul.f32 %v336, %v312
    %v437 = vmul.f32 %v336, %v313
    %v438 = vadd.f32 %v434, %v436
    %v439 = vadd.f32 %v435, %v437
    %v440 = vmul.f32 %v344, %v300
    %v441 = vmul.f32 %v344, %v301
    %v442 = vadd.f32 %v350, %v440
    %v443 = vadd.f32 %v350, %v441
    %v444 = vmul.f32 %v356, %v306
    %v445 = vmul.f32 %v356, %v307
    %v446 = vadd.f32 %v442, %v444
    %v447 = vadd.f32 %v443, %v445
    %v448 = vmul.f32 %v364, %v312
    %v449 = vmul.f32 %v364, %v313
    %v450 = vadd.f32 %v446, %v448
    %v451 = vadd.f32 %v447, %v449
    %v452 = vmul.f32 %v372, %v300
    %v453 = vmul.f32 %v372, %v301
    %v454 = vadd.f32 %v378, %v452
    %v455 = vadd.f32 %v378, %v453
    %v456 = vmul.f32 %v384, %v306
    %v457 = vmul.f32 %v384, %v307
    %v458 = vadd.f32 %v454, %v456
    %v459 = vadd.f32 %v455, %v457
    %v460 = vmul.f32 %v392, %v312
    %v461 = vmul.f32 %v392, %v313
    %v462 = vadd.f32 %v458, %v460
    %v463 = vadd.f32 %v459, %v461
    %v464 = vtanh.pop %v438
    %v465 = vtanh.pop %v439
    %v466 = vmul.f32 %v402, %v464
    %v467 = vmul.f32 %v402, %v465
    %v468 = vadd.f32 %v438, %v466
    %v469 = vadd.f32 %v439, %v467
    %v470 = vtanh.pop %v450
    %v471 = vtanh.pop %v451
    %v472 = vmul.f32 %v412, %v470
    %v473 = vmul.f32 %v412, %v471
    %v474 = vadd.f32 %v450, %v472
    %v475 = vadd.f32 %v451, %v473
    %v476 = vtanh.pop %v462
    %v477 = vtanh.pop %v463
    %v478 = vmul.f32 %v422, %v476
    %v479 = vmul.f32 %v422, %v477
    %v480 = vadd.f32 %v462, %v478
    %v481 = vadd.f32 %v463, %v479
    %482 = vset.pattern.permute.xlu0 42
    %483 = vperm.xlu0 %482, %v42
    %v484 = vpop.permute.xlu0 %483
    %v486 = vmul.f32 %v484, %v406
    %v487 = vmul.f32 %v484, %v407
    %488 = vset.pattern.permute.xlu0 51
    %489 = vperm.xlu0 %488, %v42
    %v490 = vpop.permute.xlu0 %489
    %v492 = vadd.f32 %v490, %v486
    %v493 = vadd.f32 %v490, %v487
    %494 = vset.pattern.permute.xlu0 43
    %495 = vperm.xlu0 %494, %v42
    %v496 = vpop.permute.xlu0 %495
    %v498 = vmul.f32 %v496, %v416
    %v499 = vmul.f32 %v496, %v417
    %v500 = vadd.f32 %v492, %v498
    %v501 = vadd.f32 %v493, %v499
    %502 = vset.pattern.permute.xlu0 44
    %503 = vperm.xlu0 %502, %v42
    %v504 = vpop.permute.xlu0 %503
    %v506 = vmul.f32 %v504, %v426
    %v507 = vmul.f32 %v504, %v427
    %v508 = vadd.f32 %v500, %v506
    %v509 = vadd.f32 %v501, %v507
    %510 = vset.pattern.permute.xlu0 45
    %511 = vperm.xlu0 %510, %v42
    %v512 = vpop.permute.xlu0 %511
    %v514 = vmul.f32 %v512, %v406
    %v515 = vmul.f32 %v512, %v407
    %516 = vset.pattern.permute.xlu0 52
    %517 = vperm.xlu0 %516, %v42
    %v518 = vpop.permute.xlu0 %517
    %v520 = vadd.f32 %v518, %v514
    %v521 = vadd.f32 %v518, %v515
    %522 = vset.pattern.permute.xlu0 46
    %523 = vperm.xlu0 %522, %v42
    %v524 = vpop.permute.xlu0 %523
    %v526 = vmul.f32 %v524, %v416
    %v527 = vmul.f32 %v524, %v417
    %v528 = vadd.f32 %v520, %v526
    %v529 = vadd.f32 %v521, %v527
    %530 = vset.pattern.permute.xlu0 47
    %531 = vperm.xlu0 %530, %v42
    %v532 = vpop.permute.xlu0 %531
    %v534 = vmul.f32 %v532, %v426
    %v535 = vmul.f32 %v532, %v427
    %v536 = vadd.f32 %v528, %v534
    %v537 = vadd.f32 %v529, %v535
    %538 = vset.pattern.permute.xlu0 48
    %539 = vperm.xlu0 %538, %v42
    %v540 = vpop.permute.xlu0 %539
    %v542 = vmul.f32 %v540, %v406
    %v543 = vmul.f32 %v540, %v407
    %544 = vset.pattern.permute.xlu0 53
    %545 = vperm.xlu0 %544, %v42
    %v546 = vpop.permute.xlu0 %545
    %v548 = vadd.f32 %v546, %v542
    %v549 = vadd.f32 %v546, %v543
    %550 = vset.pattern.permute.xlu0 49
    %551 = vperm.xlu0 %550, %v42
    %v552 = vpop.permute.xlu0 %551
    %v554 = vmul.f32 %v552, %v416
    %v555 = vmul.f32 %v552, %v417
    %v556 = vadd.f32 %v548, %v554
    %v557 = vadd.f32 %v549, %v555
    %558 = vset.pattern.permute.xlu0 50
    %559 = vperm.xlu0 %558, %v42
    %v560 = vpop.permute.xlu0 %559
    %v562 = vmul.f32 %v560, %v426
    %v563 = vmul.f32 %v560, %v427
    %v564 = vadd.f32 %v556, %v562
    %v565 = vadd.f32 %v557, %v563
    %v566 = vtanh.pop %v508
    %v567 = vtanh.pop %v509
    %568 = vset.pattern.permute.xlu0 54
    %569 = vperm.xlu0 %568, %v42
    %v570 = vpop.permute.xlu0 %569
    %v572 = vmul.f32 %v570, %v566
    %v573 = vmul.f32 %v570, %v567
    %v574 = vadd.f32 %v508, %v572
    %v575 = vadd.f32 %v509, %v573
    %v576 = vtanh.pop %v536
    %v577 = vtanh.pop %v537
    %578 = vset.pattern.permute.xlu0 55
    %579 = vperm.xlu0 %578, %v42
    %v580 = vpop.permute.xlu0 %579
    %v582 = vmul.f32 %v580, %v576
    %v583 = vmul.f32 %v580, %v577
    %v584 = vadd.f32 %v536, %v582
    %v585 = vadd.f32 %v537, %v583
    %v586 = vtanh.pop %v564
    %v587 = vtanh.pop %v565
    %588 = vset.pattern.permute.xlu0 56
    %589 = vperm.xlu0 %588, %v42
    %v590 = vpop.permute.xlu0 %589
    %v592 = vmul.f32 %v590, %v586
    %v593 = vmul.f32 %v590, %v587
    %v594 = vadd.f32 %v564, %v592
    %v595 = vadd.f32 %v565, %v593
    %v596 = vmul.f32 %v484, %v468
    %v597 = vmul.f32 %v484, %v469
    %v598 = vadd.f32 %v490, %v596
    %v599 = vadd.f32 %v490, %v597
    %v600 = vmul.f32 %v496, %v474
    %v601 = vmul.f32 %v496, %v475
    %v602 = vadd.f32 %v598, %v600
    %v603 = vadd.f32 %v599, %v601
    %v604 = vmul.f32 %v504, %v480
    %v605 = vmul.f32 %v504, %v481
    %v606 = vadd.f32 %v602, %v604
    %v607 = vadd.f32 %v603, %v605
    %v608 = vmul.f32 %v512, %v468
    %v609 = vmul.f32 %v512, %v469
    %v610 = vadd.f32 %v518, %v608
    %v611 = vadd.f32 %v518, %v609
    %v612 = vmul.f32 %v524, %v474
    %v613 = vmul.f32 %v524, %v475
    %v614 = vadd.f32 %v610, %v612
    %v615 = vadd.f32 %v611, %v613
    %v616 = vmul.f32 %v532, %v480
    %v617 = vmul.f32 %v532, %v481
    %v618 = vadd.f32 %v614, %v616
    %v619 = vadd.f32 %v615, %v617
    %v620 = vmul.f32 %v540, %v468
    %v621 = vmul.f32 %v540, %v469
    %v622 = vadd.f32 %v546, %v620
    %v623 = vadd.f32 %v546, %v621
    %v624 = vmul.f32 %v552, %v474
    %v625 = vmul.f32 %v552, %v475
    %v626 = vadd.f32 %v622, %v624
    %v627 = vadd.f32 %v623, %v625
    %v628 = vmul.f32 %v560, %v480
    %v629 = vmul.f32 %v560, %v481
    %v630 = vadd.f32 %v626, %v628
    %v631 = vadd.f32 %v627, %v629
    %v632 = vtanh.pop %v606
    %v633 = vtanh.pop %v607
    %v634 = vmul.f32 %v570, %v632
    %v635 = vmul.f32 %v570, %v633
    %v636 = vadd.f32 %v606, %v634
    %v637 = vadd.f32 %v607, %v635
    %v638 = vtanh.pop %v618
    %v639 = vtanh.pop %v619
    %v640 = vmul.f32 %v580, %v638
    %v641 = vmul.f32 %v580, %v639
    %v642 = vadd.f32 %v618, %v640
    %v643 = vadd.f32 %v619, %v641
    %v644 = vtanh.pop %v630
    %v645 = vtanh.pop %v631
    %v646 = vmul.f32 %v590, %v644
    %v647 = vmul.f32 %v590, %v645
    %v648 = vadd.f32 %v630, %v646
    %v649 = vadd.f32 %v631, %v647
    %650 = vset.pattern.permute.xlu0 57
    %651 = vperm.xlu0 %650, %v42
    %v652 = vpop.permute.xlu0 %651
    %v654 = vmul.f32 %v652, %v574
    %v655 = vmul.f32 %v652, %v575
    %656 = vset.pattern.permute.xlu0 60
    %657 = vperm.xlu0 %656, %v42
    %v658 = vpop.permute.xlu0 %657
    %v660 = vadd.f32 %v658, %v654
    %v661 = vadd.f32 %v658, %v655
    %662 = vset.pattern.permute.xlu0 58
    %663 = vperm.xlu0 %662, %v42
    %v664 = vpop.permute.xlu0 %663
    %v666 = vmul.f32 %v664, %v584
    %v667 = vmul.f32 %v664, %v585
    %v668 = vadd.f32 %v660, %v666
    %v669 = vadd.f32 %v661, %v667
    %670 = vset.pattern.permute.xlu0 59
    %671 = vperm.xlu0 %670, %v42
    %v672 = vpop.permute.xlu0 %671
    %v674 = vmul.f32 %v672, %v594
    %v675 = vmul.f32 %v672, %v595
    %v676 = vadd.f32 %v668, %v674
    %v677 = vadd.f32 %v669, %v675
    %v678 = vmul.f32 %v652, %v636
    %v679 = vmul.f32 %v652, %v637
    %v680 = vadd.f32 %v658, %v678
    %v681 = vadd.f32 %v658, %v679
    %v682 = vmul.f32 %v664, %v642
    %v683 = vmul.f32 %v664, %v643
    %v684 = vadd.f32 %v680, %v682
    %v685 = vadd.f32 %v681, %v683
    %v686 = vmul.f32 %v672, %v648
    %v687 = vmul.f32 %v672, %v649
    %v688 = vadd.f32 %v684, %v686
    %v689 = vadd.f32 %v685, %v687
    %v690 = vmul.f32 %v688, 0.5
    %v691 = vmul.f32 %v689, 0.5
    %v692 = vtanh.pop %v690
    %v693 = vtanh.pop %v691
    %v694 = vmul.f32 %v676, 0.5
    %v695 = vmul.f32 %v677, 0.5
    %v696 = vtanh.pop %v694
    %v697 = vtanh.pop %v695
    %v698 = vsub.f32 %v692, %v696
    %v699 = vsub.f32 %v693, %v697
    %v700 = vmul.f32 %v698, 0.5
    %v701 = vmul.f32 %v699, 0.5
    %v702 = vmax.f32 %v700, 1e-09
    %v703 = vmax.f32 %v701, 1e-09
    %704 = vst [vmem:[#allocation7] sm:$0xff] %v702
    %705 = vst [vmem:[#allocation7 + $0x8] sm:$0xff] %v703
    // Predicated region
    $region18: #{tpu_custom_call.1} parent=1 // pred_check
      _
    $region19: #{tpu_custom_call.1} parent=1 // pred_check_branch
      %707 = sbr.rel (0) target = $region21
    $region20: #{tpu_custom_call.1} parent=1 // pred_region
      %709 = vsyncadd [#allocation4], 0
      %s711 = sshll.u32 [#allocation7], 4
      %s712 = int_to_ptr.vmem [resolvable:$true] %s711
      %s713 = sshll.u32 %s2, 4
      %s714 = int_to_ptr.hbm [resolvable:$true] %s713
      %716 = dma.vmem_to_hbm [thread:$0]  %s712, 256, %s714, [#allocation4]
    $region21: #{tpu_custom_call.1} parent=1 // pred_fallthru
      _
    // Predicated region
    $region22: #{tpu_custom_call.1} parent=1 // pred_check
      _
    $region23: #{tpu_custom_call.1} parent=1 // pred_check_branch
      %718 = sbr.rel (0) target = $region25
    $region24: #{tpu_custom_call.1} parent=1 // pred_region
      %720 = dma.done [#allocation4], 256
    $region25: #{tpu_custom_call.1} parent=1 // pred_fallthru
      _
    %721 = vsyncpa [#allocation3], 1
    %722 = vsyncpa [#allocation6], 1
    %723 = vsyncpa [#allocation4], 1

</llo_original>
